<compile_context>
chip_gen: v7x
topology: tpu7x:2x2x1
jax: 0.10.0
libtpu: 0.0.40
codegen_flags: <defaults>
</compile_context>

<pallas_src>
import functools
import math

import jax
import jax.numpy as jnp
import numpy as np
from jax.experimental import pallas as pl
from jax.experimental.pallas import tpu as pltpu

MATMUL_DTYPE = jnp.bfloat16   # MXU operand dtype (accumulation/epilogue stay f32)


def _round_up(x, m):
    return (x + m - 1) // m * m


def _vmem_limit(*block_bytes):
    need = 2 * sum(int(b) for b in block_bytes)            # double-buffered blocks
    return int(min(max(4 * need, 4 * 1024 * 1024), 32 * 1024 * 1024))


# --------------------- fused Conv2d + bias + ReLU + MaxPool2d(2) ---------------------


def _conv_block_kernel(x_ref, w_ref, b_ref, o_ref, *, k, h_out, out_pad):
    """One image per grid step.

    x_ref : (Hp, W*Cin)         f32, H zero-padded rows, lanes = (w, cin)
    w_ref : (k, W*Cin, W*Cout)  bf16 banded tap matrices, cols ordered (w%2, w//2, co)
    b_ref : (1, (W//2)*Cout)    f32 bias per pooled output column (w2, co)
    o_ref : (out_pad + h_out + out_pad, (W//2)*Cout) f32 (pre-padded for next conv)
    """
    lq = w_ref.shape[2]
    half = lq // 2
    acc_top = jnp.zeros((h_out, lq), jnp.float32)    # conv rows 2*h2   (pool window top)
    acc_bot = jnp.zeros((h_out, lq), jnp.float32)    # conv rows 2*h2+1 (pool window bottom)
    for kh in range(k):                              # static unroll (k matmul pairs)
        w_kh = w_ref[kh]
        a_top = x_ref[pl.ds(kh, h_out, stride=2), :].astype(MATMUL_DTYPE)
        a_bot = x_ref[pl.ds(kh + 1, h_out, stride=2), :].astype(MATMUL_DTYPE)
        acc_top += jnp.dot(a_top, w_kh, preferred_element_type=jnp.float32)
        acc_bot += jnp.dot(a_bot, w_kh, preferred_element_type=jnp.float32)
    m = jnp.maximum(acc_top, acc_bot)                # vertical 2x1 max
    m = jnp.maximum(m[:, :half], m[:, half:])        # horizontal 1x2 max (even/odd halves)
    y = jnp.maximum(m + b_ref[...], 0.0)             # bias + ReLU (commute with max)
    if out_pad > 0:                                  # emit next layer's H zero padding
        zeros = jnp.zeros((out_pad, half), o_ref.dtype)
        o_ref[pl.ds(0, out_pad), :] = zeros
        o_ref[pl.ds(out_pad + h_out, out_pad), :] = zeros
    o_ref[pl.ds(out_pad, h_out), :] = y.astype(o_ref.dtype)


def conv_relu_pool(x_pad, taps, bias_row, out_pad):
    """x_pad: (N, Hp, W*Cin) f32 with H pre-padded.
    Returns (N, out_pad + H//2 + out_pad, (W//2)*Cout) f32."""
    n, hp, lin = x_pad.shape
    k, lin2, lq = taps.shape
    assert lin == lin2
    h = hp - (k - 1)
    assert h % 2 == 0
    h_out = h // 2
    half = lq // 2
    ho = h_out + 2 * out_pad

    kernel = functools.partial(_conv_block_kernel, k=k, h_out=h_out, out_pad=out_pad)
    flops = 2 * n * 2 * k * h_out * lin * lq
    bytes_accessed = (x_pad.size * x_pad.dtype.itemsize
                      + taps.size * taps.dtype.itemsize
                      + bias_row.size * 4 + n * ho * half * 4)
    block_bytes = (hp * lin * 4, k * lin * lq * taps.dtype.itemsize,
                   half * 4, ho * half * 4)
    return pl.pallas_call(
        kernel,
        out_shape=jax.ShapeDtypeStruct((n, ho, half), jnp.float32),
        grid=(n,),
        in_specs=[
            pl.BlockSpec((None, hp, lin), lambda i: (i, 0, 0)),
            pl.BlockSpec((k, lin, lq), lambda i: (0, 0, 0)),   # resident, fetched once
            pl.BlockSpec((1, half), lambda i: (0, 0)),
        ],
        out_specs=pl.BlockSpec((None, ho, half), lambda i: (i, 0, 0)),
        compiler_params=pltpu.CompilerParams(
            dimension_semantics=("parallel",),
            vmem_limit_bytes=_vmem_limit(*block_bytes)),
        cost_estimate=pl.CostEstimate(flops=flops, transcendentals=0,
                                      bytes_accessed=int(bytes_accessed)),
    )(x_pad, taps, bias_row)


# --------------------------------- Linear layer --------------------------------------


def _linear_kernel(x_ref, w_ref, b_ref, o_ref):
    a = x_ref[...].astype(MATMUL_DTYPE)
    acc = jnp.dot(a, w_ref[...], preferred_element_type=jnp.float32)
    o_ref[...] = (acc + b_ref[...]).astype(o_ref.dtype)


def linear(x, w, bias_row, tile_m=512):
    m, kdim = x.shape
    kdim2, nout = w.shape
    assert kdim == kdim2
    tm = min(tile_m, _round_up(m, 8))
    mp = _round_up(m, tm)
    if mp != m:
        x = jnp.pad(x, ((0, mp - m), (0, 0)))
    block_bytes = (tm * kdim * 4, kdim * nout * w.dtype.itemsize, nout * 4, tm * nout * 4)
    out = pl.pallas_call(
        _linear_kernel,
        out_shape=jax.ShapeDtypeStruct((mp, nout), jnp.float32),
        grid=(mp // tm,),
        in_specs=[
            pl.BlockSpec((tm, kdim), lambda i: (i, 0)),
            pl.BlockSpec((kdim, nout), lambda i: (0, 0)),
            pl.BlockSpec((1, nout), lambda i: (0, 0)),
        ],
        out_specs=pl.BlockSpec((tm, nout), lambda i: (i, 0)),
        compiler_params=pltpu.CompilerParams(
            dimension_semantics=("parallel",),
            vmem_limit_bytes=_vmem_limit(*block_bytes)),
        cost_estimate=pl.CostEstimate(
            flops=2 * mp * kdim * nout, transcendentals=0,
            bytes_accessed=int(mp * kdim * 4 + kdim * nout * w.dtype.itemsize
                               + nout * 4 + mp * nout * 4)),
    )(x, w, bias_row)
    return out[:m]


# --------------------------- parameters (PyTorch-equivalent) -------------------------


def init_cnn_encoder_params(layer_sizes, input_size, output_size, key, kernel_size=5):
    """Deterministic params matching CNN_Encoder.__init__ shapes/init (defaults)."""
    layer_sizes = list(layer_sizes) + [output_size]
    params = []
    current_size = input_size
    current_channels = 1
    for l_id in range(len(layer_sizes) - 1):
        key, kw_, kb_ = jax.random.split(key, 3)
        if l_id == len(layer_sizes) - 2:
            fan_in = int(current_size * current_size * current_channels)
            bound = 1.0 / math.sqrt(fan_in)
            w = jax.random.uniform(kw_, (layer_sizes[l_id + 1], fan_in),
                                   jnp.float32, -bound, bound)
            b = jax.random.uniform(kb_, (layer_sizes[l_id + 1],),
                                   jnp.float32, -bound, bound)
            params.append(("linear", w, b))
        else:
            c_out = layer_sizes[l_id]
            fan_in = current_channels * kernel_size * kernel_size
            bound = 1.0 / math.sqrt(fan_in)
            w = jax.random.uniform(
                kw_, (c_out, current_channels, kernel_size, kernel_size),
                jnp.float32, -bound, bound)
            b = jax.random.uniform(kb_, (c_out,), jnp.float32, -bound, bound)
            params.append(("conv", w, b))
            current_size = current_size // 2
            current_channels = c_out
    return params


def _build_conv_taps(w_oihw, width):
    """(Cout,Cin,k,k) OIHW conv weight -> (k, width*Cin, width*Cout) banded tap
    matrices.  Rows index (w_in, cin) over the *unpadded* width (horizontal zero
    padding folded in); columns are ordered (w_out%2, w_out//2, cout) so the 1x2
    horizontal pool is a max of two contiguous lane halves."""
    c_out, c_in, k, _ = w_oihw.shape
    assert width % 2 == 0
    pad = (k - 1) // 2
    w2 = width // 2
    taps = np.zeros((k, width * c_in, width * c_out), np.float32)
    w_np = np.asarray(w_oihw, np.float32)
    for kh in range(k):
        for kw in range(k):
            tap = w_np[:, :, kh, kw].T                     # (Cin, Cout)
            for wo in range(width):
                wi = wo + kw - pad
                if wi < 0 or wi >= width:
                    continue                               # horizontal zero padding
                col0 = (wo % 2) * (w2 * c_out) + (wo // 2) * c_out
                taps[kh, wi * c_in:(wi + 1) * c_in, col0:col0 + c_out] = tap
    return taps


def prepare_params(params, input_size):
    """One-time transform of PyTorch-shaped params into kernel-ready tensors."""
    prepared = []
    size = input_size
    channels = 1
    for idx, (kind, w, b) in enumerate(params):
        if kind == "conv":
            k = int(w.shape[-1])
            c_out = int(w.shape[0])
            taps = _build_conv_taps(np.asarray(w), size)
            bias_row = np.tile(np.asarray(b, np.float32), size // 2)[None, :]
            nxt = params[idx + 1] if idx + 1 < len(params) else None
            out_pad = (int(nxt[1].shape[-1]) // 2) if (nxt is not None and nxt[0] == "conv") else 0
            prepared.append(dict(kind="conv", k=k,
                                 taps=jnp.asarray(taps, MATMUL_DTYPE),
                                 bias=jnp.asarray(bias_row, jnp.float32),
                                 out_pad=out_pad))
            size //= 2
            channels = c_out
        else:
            h2, w2, c = size, size, channels
            # our flatten order is (h, w, c); PyTorch's is (c, h, w) -> permute columns.
            pt_index = np.arange(c * h2 * w2).reshape(c, h2, w2).transpose(1, 2, 0).reshape(-1)
            w_perm = np.asarray(w, np.float32).T[pt_index, :]          # (h2*w2*c, out)
            prepared.append(dict(kind="linear",
                                 w=jnp.asarray(w_perm, MATMUL_DTYPE),
                                 bias=jnp.asarray(np.asarray(b, np.float32)[None, :])))
    return prepared


# ----------------------------------- forward -----------------------------------------


def cnn_encoder_forward(prepared, x_nchw):
    n, c, h, w = x_nchw.shape
    # NCHW -> rows = h, lanes = (w, c); stays in this layout for the whole network.
    x = jnp.transpose(x_nchw, (0, 2, 3, 1)).reshape(n, h, w * c).astype(jnp.float32)
    first_conv = True
    for layer in prepared:
        if layer["kind"] == "conv":
            if first_conv:
                p = layer["k"] // 2
                x = jnp.pad(x, ((0, 0), (p, p), (0, 0)))   # one-time vertical padding
                first_conv = False
            x = conv_relu_pool(x, layer["taps"], layer["bias"], layer["out_pad"])
        else:
            x = x.reshape(n, -1)                            # (h, w, c) flatten order,
            x = linear(x, layer["w"], layer["bias"])        # permutation folded into w
    return x


# --------------------------- pure-JAX reference (for check) --------------------------


def reference_forward(params, x_nchw):
    x = x_nchw
    for kind, w, b in params:
        if kind == "conv":
            k = w.shape[-1]
            p = (k - 1) // 2
            x = jax.lax.conv_general_dilated(
                x, w, window_strides=(1, 1), padding=[(p, p), (p, p)],
                dimension_numbers=("NCHW", "OIHW", "NCHW"),
                precision=jax.lax.Precision.HIGHEST)
            x = jnp.maximum(x + b[None, :, None, None], 0.0)
            nn_, cc, hh, ww = x.shape
            x = x.reshape(nn_, cc, hh // 2, 2, ww // 2, 2).max(axis=(3, 5))
        else:
            x = x.reshape(x.shape[0], -1)
            x = jnp.dot(x, w.T, precision=jax.lax.Precision.HIGHEST) + b
    return x


if __name__ == "__main__":
    key = jax.random.PRNGKey(0)
    layer_sizes = [4, 8]      # conv blocks: 1->4 and 4->8 channels
    input_size = 16           # 16 -> 8 -> 4 spatial; linear fan-in = 4*4*8 = 128
    output_size = 32
    batch = 2

    params = init_cnn_encoder_params(layer_sizes, input_size, output_size, key)
    prepared = prepare_params(params, input_size)
    x = jax.random.normal(jax.random.fold_in(key, 123),
                          (batch, 1, input_size, input_size), jnp.float32)

    fwd = jax.jit(lambda xx: cnn_encoder_forward(prepared, xx))
    out = jax.block_until_ready(fwd(x))
    assert out.shape == (batch, output_size), out.shape
    assert out.dtype == jnp.float32

    ref = jax.block_until_ready(reference_forward(params, x))
    err = float(jnp.max(jnp.abs(out - ref)))
    scale = float(jnp.max(jnp.abs(ref)))
    # bf16 MXU operands with f32 accumulation: allow a few % of the output scale.
    assert err <= 5e-2 * scale + 1e-3, ("numeric mismatch", err, scale)
    print("KERNEL_OK")
</pallas_src>

<mosaic_0001>
module attributes {stable_mosaic.version = 11 : i64} {
  func.func @_conv_block_kernel(%arg0: i32, %arg1: memref<1x20x16xf32, #tpu.memory_space<vmem>>, %arg2: memref<5x16x64xbf16, #tpu.memory_space<vmem>>, %arg3: memref<1x32xf32, #tpu.memory_space<vmem>>, %arg4: memref<1x8x32xf32, #tpu.memory_space<vmem>>) attributes {dimension_semantics = [#tpu.dimension_semantics<parallel>], iteration_bounds = array<i64: 2>, scalar_prefetch = 0 : i64, scratch_operands = 0 : i64, tpu.core_type = #tpu.core_type<tc>, window_params = [{transform_indices = @transform_0, window_bounds = array<i64: 1, 20, 16>}, {pipeline_mode = #tpu.pipeline_mode<synchronous>, transform_indices = @transform_1, window_bounds = array<i64: 5, 16, 64>}, {pipeline_mode = #tpu.pipeline_mode<synchronous>, transform_indices = @transform_2, window_bounds = array<i64: 1, 32>}, {transform_indices = @transform_3, window_bounds = array<i64: 1, 8, 32>}]} {
    %cst = arith.constant 0.000000e+00 : f32
    %0 = vector.broadcast %cst : f32 to vector<8x64xf32>
    %cst_0 = arith.constant 0.000000e+00 : f32
    %1 = vector.broadcast %cst_0 : f32 to vector<8x64xf32>
    %c0 = arith.constant 0 : index
    %c0_1 = arith.constant 0 : index
    %c0_2 = arith.constant 0 : index
    %2 = vector.load %arg2[%c0, %c0_1, %c0_2] : memref<5x16x64xbf16, #tpu.memory_space<vmem>>, vector<1x16x64xbf16>
    %3 = vector.shape_cast %2 : vector<1x16x64xbf16> to vector<16x64xbf16>
    %c0_3 = arith.constant 0 : index
    %c0_4 = arith.constant 0 : index
    %c0_5 = arith.constant 0 : index
    %4 = tpu.strided_load %arg1[%c0_3, %c0_4, %c0_5] {strides = array<i32: 1, 2, 1>} : memref<1x20x16xf32, #tpu.memory_space<vmem>>, vector<1x8x16xf32>
    %5 = vector.shape_cast %4 : vector<1x8x16xf32> to vector<8x16xf32>
    %6 = arith.truncf %5 : vector<8x16xf32> to vector<8x16xbf16>
    %c0_6 = arith.constant 0 : index
    %c1 = arith.constant 1 : index
    %c0_7 = arith.constant 0 : index
    %7 = tpu.strided_load %arg1[%c0_6, %c1, %c0_7] {strides = array<i32: 1, 2, 1>} : memref<1x20x16xf32, #tpu.memory_space<vmem>>, vector<1x8x16xf32>
    %8 = vector.shape_cast %7 : vector<1x8x16xf32> to vector<8x16xf32>
    %9 = arith.truncf %8 : vector<8x16xf32> to vector<8x16xbf16>
    %cst_8 = arith.constant dense<0.000000e+00> : vector<8x64xf32>
    %10 = tpu.matmul %6, %3, %cst_8 {dimension_numbers = #tpu.dot_dimension_numbers<[1], [0], [0], [1], [0, 0, 1, 1], [], []>} : vector<8x16xbf16>, vector<16x64xbf16>, vector<8x64xf32> -> vector<8x64xf32>
    %11 = arith.addf %0, %10 : vector<8x64xf32>
    %cst_9 = arith.constant dense<0.000000e+00> : vector<8x64xf32>
    %12 = tpu.matmul %9, %3, %cst_9 {dimension_numbers = #tpu.dot_dimension_numbers<[1], [0], [0], [1], [0, 0, 1, 1], [], []>} : vector<8x16xbf16>, vector<16x64xbf16>, vector<8x64xf32> -> vector<8x64xf32>
    %13 = arith.addf %1, %12 : vector<8x64xf32>
    %c1_10 = arith.constant 1 : index
    %c0_11 = arith.constant 0 : index
    %c0_12 = arith.constant 0 : index
    %14 = vector.load %arg2[%c1_10, %c0_11, %c0_12] : memref<5x16x64xbf16, #tpu.memory_space<vmem>>, vector<1x16x64xbf16>
    %15 = vector.shape_cast %14 : vector<1x16x64xbf16> to vector<16x64xbf16>
    %c0_13 = arith.constant 0 : index
    %c1_14 = arith.constant 1 : index
    %c0_15 = arith.constant 0 : index
    %16 = tpu.strided_load %arg1[%c0_13, %c1_14, %c0_15] {strides = array<i32: 1, 2, 1>} : memref<1x20x16xf32, #tpu.memory_space<vmem>>, vector<1x8x16xf32>
    %17 = vector.shape_cast %16 : vector<1x8x16xf32> to vector<8x16xf32>
    %18 = arith.truncf %17 : vector<8x16xf32> to vector<8x16xbf16>
    %c0_16 = arith.constant 0 : index
    %c2 = arith.constant 2 : index
    %c0_17 = arith.constant 0 : index
    %19 = tpu.strided_load %arg1[%c0_16, %c2, %c0_17] {strides = array<i32: 1, 2, 1>} : memref<1x20x16xf32, #tpu.memory_space<vmem>>, vector<1x8x16xf32>
    %20 = vector.shape_cast %19 : vector<1x8x16xf32> to vector<8x16xf32>
    %21 = arith.truncf %20 : vector<8x16xf32> to vector<8x16xbf16>
    %cst_18 = arith.constant dense<0.000000e+00> : vector<8x64xf32>
    %22 = tpu.matmul %18, %15, %cst_18 {dimension_numbers = #tpu.dot_dimension_numbers<[1], [0], [0], [1], [0, 0, 1, 1], [], []>} : vector<8x16xbf16>, vector<16x64xbf16>, vector<8x64xf32> -> vector<8x64xf32>
    %23 = arith.addf %11, %22 : vector<8x64xf32>
    %cst_19 = arith.constant dense<0.000000e+00> : vector<8x64xf32>
    %24 = tpu.matmul %21, %15, %cst_19 {dimension_numbers = #tpu.dot_dimension_numbers<[1], [0], [0], [1], [0, 0, 1, 1], [], []>} : vector<8x16xbf16>, vector<16x64xbf16>, vector<8x64xf32> -> vector<8x64xf32>
    %25 = arith.addf %13, %24 : vector<8x64xf32>
    %c2_20 = arith.constant 2 : index
    %c0_21 = arith.constant 0 : index
    %c0_22 = arith.constant 0 : index
    %26 = vector.load %arg2[%c2_20, %c0_21, %c0_22] : memref<5x16x64xbf16, #tpu.memory_space<vmem>>, vector<1x16x64xbf16>
    %27 = vector.shape_cast %26 : vector<1x16x64xbf16> to vector<16x64xbf16>
    %c0_23 = arith.constant 0 : index
    %c2_24 = arith.constant 2 : index
    %c0_25 = arith.constant 0 : index
    %28 = tpu.strided_load %arg1[%c0_23, %c2_24, %c0_25] {strides = array<i32: 1, 2, 1>} : memref<1x20x16xf32, #tpu.memory_space<vmem>>, vector<1x8x16xf32>
    %29 = vector.shape_cast %28 : vector<1x8x16xf32> to vector<8x16xf32>
    %30 = arith.truncf %29 : vector<8x16xf32> to vector<8x16xbf16>
    %c0_26 = arith.constant 0 : index
    %c3 = arith.constant 3 : index
    %c0_27 = arith.constant 0 : index
    %31 = tpu.strided_load %arg1[%c0_26, %c3, %c0_27] {strides = array<i32: 1, 2, 1>} : memref<1x20x16xf32, #tpu.memory_space<vmem>>, vector<1x8x16xf32>
    %32 = vector.shape_cast %31 : vector<1x8x16xf32> to vector<8x16xf32>
    %33 = arith.truncf %32 : vector<8x16xf32> to vector<8x16xbf16>
    %cst_28 = arith.constant dense<0.000000e+00> : vector<8x64xf32>
    %34 = tpu.matmul %30, %27, %cst_28 {dimension_numbers = #tpu.dot_dimension_numbers<[1], [0], [0], [1], [0, 0, 1, 1], [], []>} : vector<8x16xbf16>, vector<16x64xbf16>, vector<8x64xf32> -> vector<8x64xf32>
    %35 = arith.addf %23, %34 : vector<8x64xf32>
    %cst_29 = arith.constant dense<0.000000e+00> : vector<8x64xf32>
    %36 = tpu.matmul %33, %27, %cst_29 {dimension_numbers = #tpu.dot_dimension_numbers<[1], [0], [0], [1], [0, 0, 1, 1], [], []>} : vector<8x16xbf16>, vector<16x64xbf16>, vector<8x64xf32> -> vector<8x64xf32>
    %37 = arith.addf %25, %36 : vector<8x64xf32>
    %c3_30 = arith.constant 3 : index
    %c0_31 = arith.constant 0 : index
    %c0_32 = arith.constant 0 : index
    %38 = vector.load %arg2[%c3_30, %c0_31, %c0_32] : memref<5x16x64xbf16, #tpu.memory_space<vmem>>, vector<1x16x64xbf16>
    %39 = vector.shape_cast %38 : vector<1x16x64xbf16> to vector<16x64xbf16>
    %c0_33 = arith.constant 0 : index
    %c3_34 = arith.constant 3 : index
    %c0_35 = arith.constant 0 : index
    %40 = tpu.strided_load %arg1[%c0_33, %c3_34, %c0_35] {strides = array<i32: 1, 2, 1>} : memref<1x20x16xf32, #tpu.memory_space<vmem>>, vector<1x8x16xf32>
    %41 = vector.shape_cast %40 : vector<1x8x16xf32> to vector<8x16xf32>
    %42 = arith.truncf %41 : vector<8x16xf32> to vector<8x16xbf16>
    %c0_36 = arith.constant 0 : index
    %c4 = arith.constant 4 : index
    %c0_37 = arith.constant 0 : index
    %43 = tpu.strided_load %arg1[%c0_36, %c4, %c0_37] {strides = array<i32: 1, 2, 1>} : memref<1x20x16xf32, #tpu.memory_space<vmem>>, vector<1x8x16xf32>
    %44 = vector.shape_cast %43 : vector<1x8x16xf32> to vector<8x16xf32>
    %45 = arith.truncf %44 : vector<8x16xf32> to vector<8x16xbf16>
    %cst_38 = arith.constant dense<0.000000e+00> : vector<8x64xf32>
    %46 = tpu.matmul %42, %39, %cst_38 {dimension_numbers = #tpu.dot_dimension_numbers<[1], [0], [0], [1], [0, 0, 1, 1], [], []>} : vector<8x16xbf16>, vector<16x64xbf16>, vector<8x64xf32> -> vector<8x64xf32>
    %47 = arith.addf %35, %46 : vector<8x64xf32>
    %cst_39 = arith.constant dense<0.000000e+00> : vector<8x64xf32>
    %48 = tpu.matmul %45, %39, %cst_39 {dimension_numbers = #tpu.dot_dimension_numbers<[1], [0], [0], [1], [0, 0, 1, 1], [], []>} : vector<8x16xbf16>, vector<16x64xbf16>, vector<8x64xf32> -> vector<8x64xf32>
    %49 = arith.addf %37, %48 : vector<8x64xf32>
    %c4_40 = arith.constant 4 : index
    %c0_41 = arith.constant 0 : index
    %c0_42 = arith.constant 0 : index
    %50 = vector.load %arg2[%c4_40, %c0_41, %c0_42] : memref<5x16x64xbf16, #tpu.memory_space<vmem>>, vector<1x16x64xbf16>
    %51 = vector.shape_cast %50 : vector<1x16x64xbf16> to vector<16x64xbf16>
    %c0_43 = arith.constant 0 : index
    %c4_44 = arith.constant 4 : index
    %c0_45 = arith.constant 0 : index
    %52 = tpu.strided_load %arg1[%c0_43, %c4_44, %c0_45] {strides = array<i32: 1, 2, 1>} : memref<1x20x16xf32, #tpu.memory_space<vmem>>, vector<1x8x16xf32>
    %53 = vector.shape_cast %52 : vector<1x8x16xf32> to vector<8x16xf32>
    %54 = arith.truncf %53 : vector<8x16xf32> to vector<8x16xbf16>
    %c0_46 = arith.constant 0 : index
    %c5 = arith.constant 5 : index
    %c0_47 = arith.constant 0 : index
    %55 = tpu.strided_load %arg1[%c0_46, %c5, %c0_47] {strides = array<i32: 1, 2, 1>} : memref<1x20x16xf32, #tpu.memory_space<vmem>>, vector<1x8x16xf32>
    %56 = vector.shape_cast %55 : vector<1x8x16xf32> to vector<8x16xf32>
    %57 = arith.truncf %56 : vector<8x16xf32> to vector<8x16xbf16>
    %cst_48 = arith.constant dense<0.000000e+00> : vector<8x64xf32>
    %58 = tpu.matmul %54, %51, %cst_48 {dimension_numbers = #tpu.dot_dimension_numbers<[1], [0], [0], [1], [0, 0, 1, 1], [], []>} : vector<8x16xbf16>, vector<16x64xbf16>, vector<8x64xf32> -> vector<8x64xf32>
    %59 = arith.addf %47, %58 : vector<8x64xf32>
    %cst_49 = arith.constant dense<0.000000e+00> : vector<8x64xf32>
    %60 = tpu.matmul %57, %51, %cst_49 {dimension_numbers = #tpu.dot_dimension_numbers<[1], [0], [0], [1], [0, 0, 1, 1], [], []>} : vector<8x16xbf16>, vector<16x64xbf16>, vector<8x64xf32> -> vector<8x64xf32>
    %61 = arith.addf %49, %60 : vector<8x64xf32>
    %62 = arith.maximumf %59, %61 : vector<8x64xf32>
    %63 = vector.extract_strided_slice %62 {offsets = [0, 0], sizes = [8, 32], strides = [1, 1]} : vector<8x64xf32> to vector<8x32xf32>
    %64 = vector.extract_strided_slice %62 {offsets = [0, 32], sizes = [8, 32], strides = [1, 1]} : vector<8x64xf32> to vector<8x32xf32>
    %65 = arith.maximumf %63, %64 : vector<8x32xf32>
    %c0_50 = arith.constant 0 : index
    %c0_51 = arith.constant 0 : index
    %66 = vector.load %arg3[%c0_50, %c0_51] : memref<1x32xf32, #tpu.memory_space<vmem>>, vector<1x32xf32>
    %67 = vector.broadcast %66 : vector<1x32xf32> to vector<8x32xf32>
    %68 = arith.addf %65, %67 : vector<8x32xf32>
    %cst_52 = arith.constant 0.000000e+00 : f32
    %69 = vector.broadcast %cst_52 : f32 to vector<8x32xf32>
    %70 = arith.maximumf %68, %69 : vector<8x32xf32>
    %c0_53 = arith.constant 0 : index
    %c0_54 = arith.constant 0 : index
    %c0_55 = arith.constant 0 : index
    %71 = vector.load %arg4[%c0_53, %c0_54, %c0_55] : memref<1x8x32xf32, #tpu.memory_space<vmem>>, vector<1x8x32xf32>
    %72 = vector.shape_cast %71 : vector<1x8x32xf32> to vector<8x32xf32>
    %73 = vector.shape_cast %70 : vector<8x32xf32> to vector<1x8x32xf32>
    tpu.vector_store %arg4[%c0_53, %c0_54, %c0_55], %73 {strides = array<i32>} : memref<1x8x32xf32, #tpu.memory_space<vmem>>, vector<1x8x32xf32>,
    return
  }
  func.func @transform_0(%arg0: i32) -> (i32, i32, i32) {
    %c0_i32 = arith.constant 0 : i32
    %c0_i32_0 = arith.constant 0 : i32
    %c0_i32_1 = arith.constant 0 : i32
    return %arg0, %c0_i32, %c0_i32_0 : i32, i32, i32
  }
  func.func @transform_1(%arg0: i32) -> (i32, i32, i32) {
    %c0_i32 = arith.constant 0 : i32
    %c0_i32_0 = arith.constant 0 : i32
    %c0_i32_1 = arith.constant 0 : i32
    %c0_i32_2 = arith.constant 0 : i32
    return %c0_i32, %c0_i32_0, %c0_i32_1 : i32, i32, i32
  }
  func.func @transform_2(%arg0: i32) -> (i32, i32) {
    %c0_i32 = arith.constant 0 : i32
    %c0_i32_0 = arith.constant 0 : i32
    %c0_i32_1 = arith.constant 0 : i32
    return %c0_i32, %c0_i32_0 : i32, i32
  }
  func.func @transform_3(%arg0: i32) -> (i32, i32, i32) {
    %c0_i32 = arith.constant 0 : i32
    %c0_i32_0 = arith.constant 0 : i32
    %c0_i32_1 = arith.constant 0 : i32
    return %arg0, %c0_i32, %c0_i32_0 : i32, i32, i32
  }
}

module attributes {stable_mosaic.version = 11 : i64} {
  func.func @_linear_kernel(%arg0: i32, %arg1: memref<8x256xf32, #tpu.memory_space<vmem>>, %arg2: memref<256x32xbf16, #tpu.memory_space<vmem>>, %arg3: memref<1x32xf32, #tpu.memory_space<vmem>>, %arg4: memref<8x32xf32, #tpu.memory_space<vmem>>) attributes {dimension_semantics = [#tpu.dimension_semantics<parallel>], iteration_bounds = array<i64: 1>, scalar_prefetch = 0 : i64, scratch_operands = 0 : i64, tpu.core_type = #tpu.core_type<tc>, window_params = [{transform_indices = @transform_0, window_bounds = array<i64: 8, 256>}, {pipeline_mode = #tpu.pipeline_mode<synchronous>, transform_indices = @transform_1, window_bounds = array<i64: 256, 32>}, {pipeline_mode = #tpu.pipeline_mode<synchronous>, transform_indices = @transform_2, window_bounds = array<i64: 1, 32>}, {transform_indices = @transform_3, window_bounds = array<i64: 8, 32>}]} {
    %c0 = arith.constant 0 : index
    %c0_0 = arith.constant 0 : index
    %0 = vector.load %arg1[%c0, %c0_0] : memref<8x256xf32, #tpu.memory_space<vmem>>, vector<8x256xf32>
    %1 = arith.truncf %0 : vector<8x256xf32> to vector<8x256xbf16>
    %c0_1 = arith.constant 0 : index
    %c0_2 = arith.constant 0 : index
    %2 = vector.load %arg2[%c0_1, %c0_2] : memref<256x32xbf16, #tpu.memory_space<vmem>>, vector<256x32xbf16>
    %cst = arith.constant dense<0.000000e+00> : vector<8x32xf32>
    %3 = tpu.matmul %1, %2, %cst {dimension_numbers = #tpu.dot_dimension_numbers<[1], [0], [0], [1], [0, 0, 1, 1], [], []>} : vector<8x256xbf16>, vector<256x32xbf16>, vector<8x32xf32> -> vector<8x32xf32>
    %c0_3 = arith.constant 0 : index
    %c0_4 = arith.constant 0 : index
    %4 = vector.load %arg3[%c0_3, %c0_4] : memref<1x32xf32, #tpu.memory_space<vmem>>, vector<1x32xf32>
    %5 = vector.broadcast %4 : vector<1x32xf32> to vector<8x32xf32>
    %6 = arith.addf %3, %5 : vector<8x32xf32>
    %c0_5 = arith.constant 0 : index
    %c0_6 = arith.constant 0 : index
    %7 = vector.load %arg4[%c0_5, %c0_6] : memref<8x32xf32, #tpu.memory_space<vmem>>, vector<8x32xf32>
    tpu.vector_store %arg4[%c0_5, %c0_6], %6 {strides = array<i32>} : memref<8x32xf32, #tpu.memory_space<vmem>>, vector<8x32xf32>,
    return
  }
  func.func @transform_0(%arg0: i32) -> (i32, i32) {
    %c0_i32 = arith.constant 0 : i32
    %c0_i32_0 = arith.constant 0 : i32
    return %arg0, %c0_i32 : i32, i32
  }
  func.func @transform_1(%arg0: i32) -> (i32, i32) {
    %c0_i32 = arith.constant 0 : i32
    %c0_i32_0 = arith.constant 0 : i32
    %c0_i32_1 = arith.constant 0 : i32
    return %c0_i32, %c0_i32_0 : i32, i32
  }
  func.func @transform_2(%arg0: i32) -> (i32, i32) {
    %c0_i32 = arith.constant 0 : i32
    %c0_i32_0 = arith.constant 0 : i32
    %c0_i32_1 = arith.constant 0 : i32
    return %c0_i32, %c0_i32_0 : i32, i32
  }
  func.func @transform_3(%arg0: i32) -> (i32, i32) {
    %c0_i32 = arith.constant 0 : i32
    %c0_i32_0 = arith.constant 0 : i32
    return %arg0, %c0_i32 : i32, i32
  }
}

</mosaic_0001>

<llo_original>
// kernel: _lambda_.3
$region0: #{_lambda_.3}
  #allocation0 [shape = 'u32[]', space=smem, size = 0x4, offset = 0x4, fixed_abs, tag = 'smem constant byte address 0x4 - core index']
  #allocation1 [shape = 'u32[144,128]{1,0:T(1,128)}', space=vmem, size = 0x12000, scoped, tag = 'internal scratch']
  %s0 = inlined_call_operand.vmem [shape: f32[8,256], index: 0, kind: input, shape index: {}]
  %s1 = inlined_call_operand.vmem [shape: bf16[256,32], index: 1, kind: input, shape index: {}]
  %s2 = inlined_call_operand.vmem [shape: f32[1,32], index: 2, kind: input, shape index: {}]
  %s3 = inlined_call_operand.vmem [shape: f32[8,32], index: 3, kind: output, shape index: {}]
  %s4 = sld [smem:[#allocation0]]
  $region22: #{_lambda_.3} parent=0
    _
  %s6 = ssub.s32 1, %s4
  %s7 = scalar_select 0, %s6, %s4
  // Predicated region
  $region2: #{_lambda_.3} parent=0 // pred_check
    _
  $region3: #{_lambda_.3} parent=0 // pred_check_branch
    %9 = sbr.rel (0) target = $region5
  $region4: #{_lambda_.3} parent=0 // pred_region
    _
  $region5: #{_lambda_.3} parent=0 // pred_fallthru
    _
  // Predicated region
  $region6: #{_lambda_.3} parent=0 // pred_check
    _
  $region7: #{_lambda_.3} parent=0 // pred_check_branch
    %11 = sbr.rel (0) target = $region9
  $region8: #{_lambda_.3} parent=0 // pred_region
    _
  $region9: #{_lambda_.3} parent=0 // pred_fallthru
    _
  // Predicated region
  $region10: #{_lambda_.3} parent=0 // pred_check
    _
  $region11: #{_lambda_.3} parent=0 // pred_check_branch
    %13 = sbr.rel (0) target = $region13
  $region12: #{_lambda_.3} parent=0 // pred_region
    _
  $region13: #{_lambda_.3} parent=0 // pred_fallthru
    _
  %v15 = vld [vmem:[%s0] sm:$0xff]
  %v16 = vld [vmem:[%s0 + $0x8] sm:$0xff]
  %v17 = vpack.c.bf16 %v15, %v15
  %v18 = vpack.c.bf16 %v16, %v16
  %v19 = vld [vmem:[%s1] sm:$0xf]
  %v20 = vld [vmem:[%s1 + $0x4] sm:$0xf]
  %v21 = vld [vmem:[%s1 + $0x8] sm:$0xf]
  %v22 = vld [vmem:[%s1 + $0xc] sm:$0xf]
  %v23 = vld [vmem:[%s1 + $0x10] sm:$0xf]
  %v24 = vld [vmem:[%s1 + $0x14] sm:$0xf]
  %v25 = vld [vmem:[%s1 + $0x18] sm:$0xf]
  %v26 = vld [vmem:[%s1 + $0x1c] sm:$0xf]
  %v27 = vld [vmem:[%s1 + $0x20] sm:$0xf]
  %v28 = vld [vmem:[%s1 + $0x24] sm:$0xf]
  %v29 = vld [vmem:[%s1 + $0x28] sm:$0xf]
  %v30 = vld [vmem:[%s1 + $0x2c] sm:$0xf]
  %v31 = vld [vmem:[%s1 + $0x30] sm:$0xf]
  %v32 = vld [vmem:[%s1 + $0x34] sm:$0xf]
  %v33 = vld [vmem:[%s1 + $0x38] sm:$0xf]
  %v34 = vld [vmem:[%s1 + $0x3c] sm:$0xf]
  %v35 = vld [vmem:[%s1 + $0x40] sm:$0xf]
  %v36 = vld [vmem:[%s1 + $0x44] sm:$0xf]
  %v37 = vld [vmem:[%s1 + $0x48] sm:$0xf]
  %v38 = vld [vmem:[%s1 + $0x4c] sm:$0xf]
  %v39 = vld [vmem:[%s1 + $0x50] sm:$0xf]
  %v40 = vld [vmem:[%s1 + $0x54] sm:$0xf]
  %v41 = vld [vmem:[%s1 + $0x58] sm:$0xf]
  %v42 = vld [vmem:[%s1 + $0x5c] sm:$0xf]
  %v43 = vld [vmem:[%s1 + $0x60] sm:$0xf]
  %v44 = vld [vmem:[%s1 + $0x64] sm:$0xf]
  %v45 = vld [vmem:[%s1 + $0x68] sm:$0xf]
  %v46 = vld [vmem:[%s1 + $0x6c] sm:$0xf]
  %v47 = vld [vmem:[%s1 + $0x70] sm:$0xf]
  %v48 = vld [vmem:[%s1 + $0x74] sm:$0xf]
  %v49 = vld [vmem:[%s1 + $0x78] sm:$0xf]
  %v50 = vld [vmem:[%s1 + $0x7c] sm:$0xf]
  %v51 = vld [vmem:[%s2] sm:$0x1]
  %v53 = vlaneseq
  %v54 = vshrl.u32 %v53, 7
  %v55 = vsub.s32 0, %v54
  %v56 = vrot.slane %v51, %v55
  %v90 = vunpack.c.l.b16 %v19
  %v91 = vunpack.c.l.b16 %v20
  %v92 = vunpack.c.l.b16 %v21
  %v93 = vunpack.c.l.b16 %v22
  %v94 = vunpack.c.l.b16 %v23
  %v95 = vunpack.c.l.b16 %v24
  %v96 = vunpack.c.l.b16 %v25
  %v97 = vunpack.c.l.b16 %v26
  %v98 = vunpack.c.l.b16 %v27
  %v99 = vunpack.c.l.b16 %v28
  %v100 = vunpack.c.l.b16 %v29
  %v101 = vunpack.c.l.b16 %v30
  %v102 = vunpack.c.l.b16 %v31
  %v103 = vunpack.c.l.b16 %v32
  %v104 = vunpack.c.l.b16 %v33
  %v105 = vunpack.c.l.b16 %v34
  %v106 = vunpack.c.l.b16 %v35
  %v107 = vunpack.c.l.b16 %v36
  %v108 = vunpack.c.l.b16 %v37
  %v109 = vunpack.c.l.b16 %v38
  %v110 = vunpack.c.l.b16 %v39
  %v111 = vunpack.c.l.b16 %v40
  %v112 = vunpack.c.l.b16 %v41
  %v113 = vunpack.c.l.b16 %v42
  %v114 = vunpack.c.l.b16 %v43
  %v115 = vunpack.c.l.b16 %v44
  %v116 = vunpack.c.l.b16 %v45
  %v117 = vunpack.c.l.b16 %v46
  %v118 = vunpack.c.l.b16 %v47
  %v119 = vunpack.c.l.b16 %v48
  %v120 = vunpack.c.l.b16 %v49
  %v121 = vunpack.c.l.b16 %v50
  %v122 = vpack.c.b16 %v91, %v90
  %v123 = vpack.c.b16 %v93, %v92
  %v124 = vpack.c.b16 %v95, %v94
  %v125 = vpack.c.b16 %v97, %v96
  %v126 = vpack.c.b16 %v99, %v98
  %v127 = vpack.c.b16 %v101, %v100
  %v128 = vpack.c.b16 %v103, %v102
  %v129 = vpack.c.b16 %v105, %v104
  %v130 = vpack.c.b16 %v107, %v106
  %v131 = vpack.c.b16 %v109, %v108
  %v132 = vpack.c.b16 %v111, %v110
  %v133 = vpack.c.b16 %v113, %v112
  %v134 = vpack.c.b16 %v115, %v114
  %v135 = vpack.c.b16 %v117, %v116
  %v136 = vpack.c.b16 %v119, %v118
  %v137 = vpack.c.b16 %v121, %v120
  %154 = vmatprep.subr.bf16.mxu0 0
  %155 = vmatpush1.bf16.msra.mxu0 %v122
  %156 = vmatprep.subr.bf16.mxu0 0
  %157 = vmatpush1.bf16.msra.mxu0 %v123
  %158 = vmatprep.subr.bf16.mxu0 0
  %159 = vmatpush1.bf16.msra.mxu0 %v124
  %160 = vmatprep.subr.bf16.mxu0 0
  %161 = vmatpush1.bf16.msra.mxu0 %v125
  %162 = vmatprep.subr.bf16.mxu0 0
  %163 = vmatpush1.bf16.msra.mxu0 %v126
  %164 = vmatprep.subr.bf16.mxu0 0
  %165 = vmatpush1.bf16.msra.mxu0 %v127
  %166 = vmatprep.subr.bf16.mxu0 0
  %167 = vmatpush1.bf16.msra.mxu0 %v128
  %168 = vmatprep.subr.bf16.mxu0 0
  %169 = vmatpush1.bf16.msra.mxu0 %v129
  %170 = vmatprep.subr.bf16.mxu0 0
  %171 = vmatpush1.bf16.msra.mxu0 %v130
  %172 = vmatprep.subr.bf16.mxu0 0
  %173 = vmatpush1.bf16.msra.mxu0 %v131
  %174 = vmatprep.subr.bf16.mxu0 0
  %175 = vmatpush1.bf16.msra.mxu0 %v132
  %176 = vmatprep.subr.bf16.mxu0 0
  %177 = vmatpush1.bf16.msra.mxu0 %v133
  %178 = vmatprep.subr.bf16.mxu0 0
  %179 = vmatpush1.bf16.msra.mxu0 %v134
  %180 = vmatprep.subr.bf16.mxu0 0
  %181 = vmatpush1.bf16.msra.mxu0 %v135
  %182 = vmatprep.subr.bf16.mxu0 0
  %183 = vmatpush1.bf16.msra.mxu0 %v136
  %184 = vmatprep.subr.bf16.mxu0 0
  %185 = vmatpush1.bf16.msra.mxu0 %v137
  %186 = vmatprep.mubr.bf16.mxu0 %v18
  %187 = vmatmul.mubr.bf16.gmra.mrb[0].mxu0 %v17
  %v188 = vpop.f32.mrb[0].mxu0
  %v189 = vadd.f32 %v56, %v188
  %v190 = vpop.f32.mrb[0].mxu0
  %v191 = vpop.f32.mrb[0].mxu0
  %v192 = vpop.f32.mrb[0].mxu0
  %193 = vdwg.mxu0
  %vm194 = vcmask 261120
  %195 = vst.msk [vmem:[%s3] sm:$0xff] %vm194, %v189
  // Predicated region
  $region14: #{_lambda_.3} parent=0 // pred_check
    _
  $region15: #{_lambda_.3} parent=0 // pred_check_branch
    %197 = sbr.rel (0) target = $region17
  $region16: #{_lambda_.3} parent=0 // pred_region
    _
  $region17: #{_lambda_.3} parent=0 // pred_fallthru
    _
  // Predicated region
  $region18: #{_lambda_.3} parent=0 // pred_check
    _
  $region19: #{_lambda_.3} parent=0 // pred_check_branch
    %199 = sbr.rel (0) target = $region21
  $region20: #{_lambda_.3} parent=0 // pred_region
    _
  $region21: #{_lambda_.3} parent=0 // pred_fallthru
    _

// kernel: _lambda_.2
$region0: #{_lambda_.2}
  #allocation0 [shape = 'u32[]', space=smem, size = 0x4, offset = 0x4, fixed_abs, tag = 'smem constant byte address 0x4 - core index']
  #allocation1 [shape = 'u32[144,128]{1,0:T(1,128)}', space=vmem, size = 0x12000, scoped, tag = 'internal scratch']
  %s0 = inlined_call_operand.vmem [shape: f32[2,20,16], index: 0, kind: input, shape index: {}]
  %s1 = inlined_call_operand.hbm [shape: bf16[5,16,64], index: 1, kind: input, shape index: {}]
  %s2 = inlined_call_operand.hbm [shape: f32[1,32], index: 2, kind: input, shape index: {}]
  %s3 = inlined_call_operand.vmem [shape: f32[2,8,32], index: 3, kind: output, shape index: {}]
  %s4 = sld [smem:[#allocation0]]
  $region53: #{_lambda_.2} parent=0
    _
  %s6 = ssub.s32 1, %s4
  %s7 = scalar_select 0, %s6, %s4
  $region1: #{_lambda_.2} parent=0
    #allocation2 [shape = 'u8[20480]{0}', space=vmem, size = 0x5000, scoped, tag = 'input window, operand 1, single buffered']
    #allocation3 [shape = 's32[2]{0}', space=sflag, size = 0x8, scoped, tag = 'scoped memory for _lambda_.2']
    #allocation4 [shape = 'u8[512]{0}', space=vmem, size = 0x400, scoped, tag = 'input window, operand 2, single buffered']
    #allocation5 [shape = 's32[1]{0}', space=sflag, size = 0x4, scoped, tag = 'scoped memory for _lambda_.2']
    %8 = vsyncpa [#allocation3], 0
    %9 = vsyncpa [#allocation5], 0
    loop: start=0, step=1, limit=4
    $region2: #{_lambda_.2} parent=1 // loop_pre_header
      _
    $region3: #{_lambda_.2} parent=1 // loop_header
      %s11 = sphi 0, %s15
      %p12 = scmp.ge.s32.totalorder %s11, 4
      %s21 = sphi 0, %s23
      %s24 = sphi 0, %s21
      %s25 = sphi 0, %s24
      %s41 = sphi 0, %s25
      %s45 = sphi 0, %s45
      %s47 = sphi 0, %s45
      %s48 = sphi 0, %s47
      %s62 = sphi 0, %s48
      %s66 = sphi 0, %s66
      %s68 = sphi 0, %s66
      %s69 = sphi 0, %s68
      %s83 = sphi 0, %s69
      %s89 = sphi 0, %s91
      %s92 = sphi 0, %s89
      %s93 = sphi 0, %s92
      %s109 = sphi 0, %s93
    $region4: #{_lambda_.2} parent=1 // loop_header_branch
      %14 = sbr.rel (%p12) target = $region8
    $region5: #{_lambda_.2} parent=1 // loop_body
      %s16 = ssub.s32 %s11, 1
      %s17 = ssub.s32 %s11, 2
      %s18 = sadd.s32 %s11, 1
      %s19 = ssub.s32 %s11, %s18
      %p20 = scmp.eq.s32.totalorder %s19, 0
      %s22 = sadd.s32 %s21, 1
      %s23 = scalar_select %p20, %s21, %s22
      %p26 = pneg %p20
      %p27 = scmp.eq.s32.totalorder %s11, 1
      %p28 = por %p26, %p27
      %p29 = scmp.ne.s32.totalorder %s21, %s24
      %p30 = scmp.eq.s32.totalorder %s11, 0
      %p31 = por %p29, %p30
      %p32 = scmp.ne.s32.totalorder %s21, %s24
      %p33 = scmp.eq.s32.totalorder %s16, 1
      %p34 = por %p32, %p33
      %p35 = scmp.ne.s32.totalorder %s24, %s25
      %p36 = scmp.eq.s32.totalorder %s16, 0
      %p37 = por %p35, %p36
      %p38 = scmp.ne.s32.totalorder %s24, %s25
      %p39 = scmp.eq.s32.totalorder %s17, 1
      %p40 = por %p38, %p39
      %p42 = scmp.ne.s32.totalorder %s25, %s41
      %p43 = scmp.eq.s32.totalorder %s17, 0
      %p44 = por %p42, %p43
      %s46 = sadd.s32 %s45, 1
      %p49 = scmp.eq.s32.totalorder %s11, 1
      %p50 = scmp.ne.s32.totalorder %s45, %s47
      %p51 = scmp.eq.s32.totalorder %s11, 0
      %p52 = por %p50, %p51
      %p53 = scmp.ne.s32.totalorder %s45, %s47
      %p54 = scmp.eq.s32.totalorder %s16, 1
      %p55 = por %p53, %p54
      %p56 = scmp.ne.s32.totalorder %s47, %s48
      %p57 = scmp.eq.s32.totalorder %s16, 0
      %p58 = por %p56, %p57
      %p59 = scmp.ne.s32.totalorder %s47, %s48
      %p60 = scmp.eq.s32.totalorder %s17, 1
      %p61 = por %p59, %p60
      %p63 = scmp.ne.s32.totalorder %s48, %s62
      %p64 = scmp.eq.s32.totalorder %s17, 0
      %p65 = por %p63, %p64
      %s67 = sadd.s32 %s66, 1
      %p70 = scmp.eq.s32.totalorder %s11, 1
      %p71 = scmp.ne.s32.totalorder %s66, %s68
      %p72 = scmp.eq.s32.totalorder %s11, 0
      %p73 = por %p71, %p72
      %p74 = scmp.ne.s32.totalorder %s66, %s68
      %p75 = scmp.eq.s32.totalorder %s16, 1
      %p76 = por %p74, %p75
      %p77 = scmp.ne.s32.totalorder %s68, %s69
      %p78 = scmp.eq.s32.totalorder %s16, 0
      %p79 = por %p77, %p78
      %p80 = scmp.ne.s32.totalorder %s68, %s69
      %p81 = scmp.eq.s32.totalorder %s17, 1
      %p82 = por %p80, %p81
      %p84 = scmp.ne.s32.totalorder %s69, %s83
      %p85 = scmp.eq.s32.totalorder %s17, 0
      %p86 = por %p84, %p85
      %s87 = ssub.s32 %s11, %s18
      %p88 = scmp.eq.s32.totalorder %s87, 0
      %s90 = sadd.s32 %s89, 1
      %s91 = scalar_select %p88, %s89, %s90
      %p94 = pneg %p88
      %p95 = scmp.eq.s32.totalorder %s11, 1
      %p96 = por %p94, %p95
      %p97 = scmp.ne.s32.totalorder %s89, %s92
      %p98 = scmp.eq.s32.totalorder %s11, 0
      %p99 = por %p97, %p98
      %p100 = scmp.ne.s32.totalorder %s89, %s92
      %p101 = scmp.eq.s32.totalorder %s16, 1
      %p102 = por %p100, %p101
      %p103 = scmp.ne.s32.totalorder %s92, %s93
      %p104 = scmp.eq.s32.totalorder %s16, 0
      %p105 = por %p103, %p104
      %p106 = scmp.ne.s32.totalorder %s92, %s93
      %p107 = scmp.eq.s32.totalorder %s17, 1
      %p108 = por %p106, %p107
      %p110 = scmp.ne.s32.totalorder %s93, %s109
      %p111 = scmp.eq.s32.totalorder %s17, 0
      %p112 = por %p110, %p111
      %p113 = scmp.le.s32.totalorder 1, %s11
      %p114 = scmp.lt.s32.totalorder %s11, 3
      %p115 = pnand %p113, %p114
      %p116 = pneg %p115
      // Predicated region
      $region9: #{_lambda_.2} parent=5 // pred_check
        _
      $region10: #{_lambda_.2} parent=5 // pred_check_branch
        %118 = sbr.rel (%p115) target = $region12
      $region11: #{_lambda_.2} parent=5 // pred_region
        %s119 = ssub.s32 %s11, 1
        // Predicated region
        $region13: #{_lambda_.2} parent=11 // pred_check
          %p120 = pneg %p58
        $region14: #{_lambda_.2} parent=11 // pred_check_branch
          %122 = sbr.rel (%p120) target = $region16
        $region15: #{_lambda_.2} parent=11 // pred_region
          %s124 = ssub.s32 640, 640
          %125 = vsyncadd [#allocation3], %s124
          %s126 = sshll.u32 [#allocation2], 4
          %s127 = int_to_ptr.vmem [resolvable:$true] %s126
          %132 = dma.hbm_to_vmem [thread:$0]  %s1, 640, %s127, [#allocation3], 64, 64, 4
        $region16: #{_lambda_.2} parent=11 // pred_fallthru
          _
        // Predicated region
        $region17: #{_lambda_.2} parent=11 // pred_check
          %p133 = pneg %p79
        $region18: #{_lambda_.2} parent=11 // pred_check_branch
          %135 = sbr.rel (%p133) target = $region20
        $region19: #{_lambda_.2} parent=11 // pred_region
          %s137 = ssub.s32 16, 16
          %138 = vsyncadd [#allocation5], %s137
          %s140 = sshll.u32 [#allocation4], 4
          %s141 = int_to_ptr.vmem [resolvable:$true] %s140
          %143 = dma.hbm_to_vmem [thread:$0]  %s2, 16, %s141, [#allocation5]
        $region20: #{_lambda_.2} parent=11 // pred_fallthru
          _
      $region12: #{_lambda_.2} parent=5 // pred_fallthru
        _
      %p144 = scmp.lt.s32.totalorder %s11, 2
      // Predicated region
      $region21: #{_lambda_.2} parent=5 // pred_check
        %p145 = pneg %p144
      $region22: #{_lambda_.2} parent=5 // pred_check_branch
        %147 = sbr.rel (%p145) target = $region24
      $region23: #{_lambda_.2} parent=5 // pred_region
        // Predicated region
        $region25: #{_lambda_.2} parent=23 // pred_check
          %p148 = pneg %p31
        $region26: #{_lambda_.2} parent=23 // pred_check_branch
          %150 = sbr.rel (%p148) target = $region28
        $region27: #{_lambda_.2} parent=23 // pred_region
          %p151 = scmp.lt.s32.totalorder %s11, 1
          %s152 = scalar_select %p151, %s11, 1
          %s153 = smul.addr %s152, 3
          %s154 = smul.addr %s153, 8
          %s155 = scalar_lea.vmem %s0, %s154
        $region28: #{_lambda_.2} parent=23 // pred_fallthru
          _
      $region24: #{_lambda_.2} parent=5 // pred_fallthru
        _
      %p156 = scmp.le.s32.totalorder 1, %s11
      %p157 = scmp.lt.s32.totalorder %s11, 3
      %p158 = pnand %p156, %p157
      %p159 = pneg %p158
      // Predicated region
      $region29: #{_lambda_.2} parent=5 // pred_check
        _
      $region30: #{_lambda_.2} parent=5 // pred_check_branch
        %161 = sbr.rel (%p158) target = $region32
      $region31: #{_lambda_.2} parent=5 // pred_region
        %s162 = ssub.s32 %s11, 1
        // Predicated region
        $region33: #{_lambda_.2} parent=31 // pred_check
          %p163 = pneg %p58
        $region34: #{_lambda_.2} parent=31 // pred_check_branch
          %165 = sbr.rel (%p163) target = $region36
        $region35: #{_lambda_.2} parent=31 // pred_region
          %166 = dma.done [#allocation3], 640
        $region36: #{_lambda_.2} parent=31 // pred_fallthru
          _
        // Predicated region
        $region37: #{_lambda_.2} parent=31 // pred_check
          %p167 = pneg %p79
        $region38: #{_lambda_.2} parent=31 // pred_check_branch
          %169 = sbr.rel (%p167) target = $region40
        $region39: #{_lambda_.2} parent=31 // pred_region
          %170 = dma.done [#allocation5], 16
        $region40: #{_lambda_.2} parent=31 // pred_fallthru
          _
        %p171 = scmp.lt.s32.totalorder %s16, 1
        %s172 = scalar_select %p171, %s16, 1
        %s173 = smul.addr %s172, 3
        %s174 = smul.addr %s173, 8
        %s175 = scalar_lea.vmem %s0, %s174
        %p176 = pneg %p37
        %p177 = pneg %p34
        %p178 = pneg %p58
        %p179 = pneg %p55
        %p180 = pneg %p79
        %p181 = pneg %p76
        %p182 = pneg %p105
        %p183 = pneg %p102
        %p184 = scmp.lt.s32.totalorder %s16, 1
        %s185 = scalar_select %p184, %s16, 1
        %s186 = smul.addr %s185, 8
        %s187 = scalar_lea.vmem %s3, %s186
        %p188 = scmp.lt.s32.totalorder %s16, 1
        %s189 = scalar_select %p188, %s16, 1
        %s190 = smul.addr %s189, 3
        %s191 = smul.addr %s190, 8
        %s192 = scalar_lea.vmem %s0, %s191
        %p193 = scmp.lt.s32.totalorder %s16, 1
        %s194 = scalar_select %p193, %s16, 1
        %s195 = smul.addr %s194, 8
        %s196 = scalar_lea.vmem %s3, %s195
        %v198 = vld [vmem:[#allocation2] sm:$0xf]
        %v199 = vld [vmem:[#allocation2 + $0x4] sm:$0xf]
        %v200 = vld [vmem:[%s192] ss:$2 sm:$0xff]
        %v201 = vpack.c.bf16 %v200, %v200
        %s202 = scalar_lea.vmem %s192, 1
        %v203 = vld [vmem:[%s202] ss:$2 sm:$0xff]
        %v204 = vpack.c.bf16 %v203, %v203
        %s205 = scalar_lea.vmem [#allocation2], 8
        %v206 = vld [vmem:[%s205] sm:$0xf]
        %v207 = vld [vmem:[%s205 + $0x4] sm:$0xf]
        %s208 = scalar_lea.vmem %s192, 2
        %v209 = vld [vmem:[%s208] ss:$2 sm:$0xff]
        %v210 = vpack.c.bf16 %v209, %v209
        %v213 = vunpack.c.l.b16 %v206
        %v214 = vunpack.c.l.b16 %v207
        %v215 = vpack.c.b16 %v214, %v213
        %vm217 = vcmask 130048
        %v219 = vsel %vm217, %v204, 0
        %221 = vmatprep.subr.bf16.mxu0 0
        %222 = vmatpush1.bf16.msra.mxu0 %v215
        %223 = vmatprep.subr.bf16.mxu0 0
        %224 = vmatpush1.bf16.msra.mxu0 0
        %225 = vmatprep.subr.bf16.mxu0 0
        %226 = vmatpush1.bf16.msra.mxu0 0
        %227 = vmatprep.subr.bf16.mxu0 0
        %228 = vmatpush1.bf16.msra.mxu0 0
        %229 = vmatprep.subr.bf16.mxu0 0
        %230 = vmatpush1.bf16.msra.mxu0 0
        %231 = vmatprep.subr.bf16.mxu0 0
        %232 = vmatpush1.bf16.msra.mxu0 0
        %233 = vmatprep.subr.bf16.mxu0 0
        %234 = vmatpush1.bf16.msra.mxu0 0
        %235 = vmatprep.subr.bf16.mxu0 0
        %236 = vmatpush1.bf16.msra.mxu0 0
        %237 = vmatprep.subr.bf16.mxu0 0
        %238 = vmatpush1.bf16.msra.mxu0 0
        %239 = vmatprep.subr.bf16.mxu0 0
        %240 = vmatpush1.bf16.msra.mxu0 0
        %241 = vmatprep.subr.bf16.mxu0 0
        %242 = vmatpush1.bf16.msra.mxu0 0
        %243 = vmatprep.subr.bf16.mxu0 0
        %244 = vmatpush1.bf16.msra.mxu0 0
        %245 = vmatprep.subr.bf16.mxu0 0
        %246 = vmatpush1.bf16.msra.mxu0 0
        %247 = vmatprep.subr.bf16.mxu0 0
        %248 = vmatpush1.bf16.msra.mxu0 0
        %249 = vmatprep.subr.bf16.mxu0 0
        %250 = vmatpush1.bf16.msra.mxu0 0
        %251 = vmatprep.subr.bf16.mxu0 0
        %252 = vmatpush1.bf16.msra.mxu0 0
        %253 = vmatprep.mubr.bf16.mxu0 0
        %254 = vmatmul.mubr.bf16.gmra.mrb[0].mxu0 %v219
        %v255 = vpop.f32.mrb[0].mxu0
        %v256 = vadd.f32 0.0, %v255
        %v257 = vpop.f32.mrb[0].mxu0
        %v258 = vpop.f32.mrb[0].mxu0
        %v259 = vpop.f32.mrb[0].mxu0
        %260 = vdwg.mxu0
        %v263 = vunpack.c.l.b16 %v198
        %v264 = vunpack.c.l.b16 %v199
        %v265 = vpack.c.b16 %v264, %v263
        %v268 = vsel %vm217, %v201, 0
        %270 = vmatprep.subr.bf16.mxu0 0
        %271 = vmatpush1.bf16.msra.mxu0 %v265
        %272 = vmatprep.subr.bf16.mxu0 0
        %273 = vmatpush1.bf16.msra.mxu0 0
        %274 = vmatprep.subr.bf16.mxu0 0
        %275 = vmatpush1.bf16.msra.mxu0 0
        %276 = vmatprep.subr.bf16.mxu0 0
        %277 = vmatpush1.bf16.msra.mxu0 0
        %278 = vmatprep.subr.bf16.mxu0 0
        %279 = vmatpush1.bf16.msra.mxu0 0
        %280 = vmatprep.subr.bf16.mxu0 0
        %281 = vmatpush1.bf16.msra.mxu0 0
        %282 = vmatprep.subr.bf16.mxu0 0
        %283 = vmatpush1.bf16.msra.mxu0 0
        %284 = vmatprep.subr.bf16.mxu0 0
        %285 = vmatpush1.bf16.msra.mxu0 0
        %286 = vmatprep.subr.bf16.mxu0 0
        %287 = vmatpush1.bf16.msra.mxu0 0
        %288 = vmatprep.subr.bf16.mxu0 0
        %289 = vmatpush1.bf16.msra.mxu0 0
        %290 = vmatprep.subr.bf16.mxu0 0
        %291 = vmatpush1.bf16.msra.mxu0 0
        %292 = vmatprep.subr.bf16.mxu0 0
        %293 = vmatpush1.bf16.msra.mxu0 0
        %294 = vmatprep.subr.bf16.mxu0 0
        %295 = vmatpush1.bf16.msra.mxu0 0
        %296 = vmatprep.subr.bf16.mxu0 0
        %297 = vmatpush1.bf16.msra.mxu0 0
        %298 = vmatprep.subr.bf16.mxu0 0
        %299 = vmatpush1.bf16.msra.mxu0 0
        %300 = vmatprep.subr.bf16.mxu0 0
        %301 = vmatpush1.bf16.msra.mxu0 0
        %302 = vmatprep.mubr.bf16.mxu0 0
        %303 = vmatmul.mubr.bf16.gmra.mrb[0].mxu0 %v268
        %v304 = vpop.f32.mrb[0].mxu0
        %v305 = vadd.f32 %v256, %v304
        %v306 = vpop.f32.mrb[0].mxu0
        %v307 = vpop.f32.mrb[0].mxu0
        %v308 = vpop.f32.mrb[0].mxu0
        %309 = vdwg.mxu0
        %v311 = vsel %vm217, %v210, 0
        %313 = vmatprep.subr.bf16.mxu0 0
        %314 = vmatpush1.bf16.msra.mxu0 %v215
        %315 = vmatprep.subr.bf16.mxu0 0
        %316 = vmatpush1.bf16.msra.mxu0 0
        %317 = vmatprep.subr.bf16.mxu0 0
        %318 = vmatpush1.bf16.msra.mxu0 0
        %319 = vmatprep.subr.bf16.mxu0 0
        %320 = vmatpush1.bf16.msra.mxu0 0
        %321 = vmatprep.subr.bf16.mxu0 0
        %322 = vmatpush1.bf16.msra.mxu0 0
        %323 = vmatprep.subr.bf16.mxu0 0
        %324 = vmatpush1.bf16.msra.mxu0 0
        %325 = vmatprep.subr.bf16.mxu0 0
        %326 = vmatpush1.bf16.msra.mxu0 0
        %327 = vmatprep.subr.bf16.mxu0 0
        %328 = vmatpush1.bf16.msra.mxu0 0
        %329 = vmatprep.subr.bf16.mxu0 0
        %330 = vmatpush1.bf16.msra.mxu0 0
        %331 = vmatprep.subr.bf16.mxu0 0
        %332 = vmatpush1.bf16.msra.mxu0 0
        %333 = vmatprep.subr.bf16.mxu0 0
        %334 = vmatpush1.bf16.msra.mxu0 0
        %335 = vmatprep.subr.bf16.mxu0 0
        %336 = vmatpush1.bf16.msra.mxu0 0
        %337 = vmatprep.subr.bf16.mxu0 0
        %338 = vmatpush1.bf16.msra.mxu0 0
        %339 = vmatprep.subr.bf16.mxu0 0
        %340 = vmatpush1.bf16.msra.mxu0 0
        %341 = vmatprep.subr.bf16.mxu0 0
        %342 = vmatpush1.bf16.msra.mxu0 0
        %343 = vmatprep.subr.bf16.mxu0 0
        %344 = vmatpush1.bf16.msra.mxu0 0
        %345 = vmatprep.mubr.bf16.mxu0 0
        %346 = vmatmul.mubr.bf16.gmra.mrb[0].mxu0 %v311
        %v347 = vpop.f32.mrb[0].mxu0
        %v348 = vadd.f32 0.0, %v347
        %v349 = vpop.f32.mrb[0].mxu0
        %v350 = vpop.f32.mrb[0].mxu0
        %v351 = vpop.f32.mrb[0].mxu0
        %352 = vdwg.mxu0
        %353 = vmatprep.subr.bf16.mxu0 0
        %354 = vmatpush1.bf16.msra.mxu0 %v265
        %355 = vmatprep.subr.bf16.mxu0 0
        %356 = vmatpush1.bf16.msra.mxu0 0
        %357 = vmatprep.subr.bf16.mxu0 0
        %358 = vmatpush1.bf16.msra.mxu0 0
        %359 = vmatprep.subr.bf16.mxu0 0
        %360 = vmatpush1.bf16.msra.mxu0 0
        %361 = vmatprep.subr.bf16.mxu0 0
        %362 = vmatpush1.bf16.msra.mxu0 0
        %363 = vmatprep.subr.bf16.mxu0 0
        %364 = vmatpush1.bf16.msra.mxu0 0
        %365 = vmatprep.subr.bf16.mxu0 0
        %366 = vmatpush1.bf16.msra.mxu0 0
        %367 = vmatprep.subr.bf16.mxu0 0
        %368 = vmatpush1.bf16.msra.mxu0 0
        %369 = vmatprep.subr.bf16.mxu0 0
        %370 = vmatpush1.bf16.msra.mxu0 0
        %371 = vmatprep.subr.bf16.mxu0 0
        %372 = vmatpush1.bf16.msra.mxu0 0
        %373 = vmatprep.subr.bf16.mxu0 0
        %374 = vmatpush1.bf16.msra.mxu0 0
        %375 = vmatprep.subr.bf16.mxu0 0
        %376 = vmatpush1.bf16.msra.mxu0 0
        %377 = vmatprep.subr.bf16.mxu0 0
        %378 = vmatpush1.bf16.msra.mxu0 0
        %379 = vmatprep.subr.bf16.mxu0 0
        %380 = vmatpush1.bf16.msra.mxu0 0
        %381 = vmatprep.subr.bf16.mxu0 0
        %382 = vmatpush1.bf16.msra.mxu0 0
        %383 = vmatprep.subr.bf16.mxu0 0
        %384 = vmatpush1.bf16.msra.mxu0 0
        %385 = vmatprep.mubr.bf16.mxu0 0
        %386 = vmatmul.mubr.bf16.gmra.mrb[0].mxu0 %v219
        %v387 = vpop.f32.mrb[0].mxu0
        %v388 = vadd.f32 %v348, %v387
        %v389 = vpop.f32.mrb[0].mxu0
        %v390 = vpop.f32.mrb[0].mxu0
        %v391 = vpop.f32.mrb[0].mxu0
        %392 = vdwg.mxu0
        %s393 = scalar_lea.vmem [#allocation2], 16
        %v394 = vld [vmem:[%s393] sm:$0xf]
        %v395 = vld [vmem:[%s393 + $0x4] sm:$0xf]
        %s396 = scalar_lea.vmem %s192, 3
        %v397 = vld [vmem:[%s396] ss:$2 sm:$0xff]
        %v398 = vpack.c.bf16 %v397, %v397
        %v401 = vunpack.c.l.b16 %v394
        %v402 = vunpack.c.l.b16 %v395
        %v403 = vpack.c.b16 %v402, %v401
        %405 = vmatprep.subr.bf16.mxu0 0
        %406 = vmatpush1.bf16.msra.mxu0 %v403
        %407 = vmatprep.subr.bf16.mxu0 0
        %408 = vmatpush1.bf16.msra.mxu0 0
        %409 = vmatprep.subr.bf16.mxu0 0
        %410 = vmatpush1.bf16.msra.mxu0 0
        %411 = vmatprep.subr.bf16.mxu0 0
        %412 = vmatpush1.bf16.msra.mxu0 0
        %413 = vmatprep.subr.bf16.mxu0 0
        %414 = vmatpush1.bf16.msra.mxu0 0
        %415 = vmatprep.subr.bf16.mxu0 0
        %416 = vmatpush1.bf16.msra.mxu0 0
        %417 = vmatprep.subr.bf16.mxu0 0
        %418 = vmatpush1.bf16.msra.mxu0 0
        %419 = vmatprep.subr.bf16.mxu0 0
        %420 = vmatpush1.bf16.msra.mxu0 0
        %421 = vmatprep.subr.bf16.mxu0 0
        %422 = vmatpush1.bf16.msra.mxu0 0
        %423 = vmatprep.subr.bf16.mxu0 0
        %424 = vmatpush1.bf16.msra.mxu0 0
        %425 = vmatprep.subr.bf16.mxu0 0
        %426 = vmatpush1.bf16.msra.mxu0 0
        %427 = vmatprep.subr.bf16.mxu0 0
        %428 = vmatpush1.bf16.msra.mxu0 0
        %429 = vmatprep.subr.bf16.mxu0 0
        %430 = vmatpush1.bf16.msra.mxu0 0
        %431 = vmatprep.subr.bf16.mxu0 0
        %432 = vmatpush1.bf16.msra.mxu0 0
        %433 = vmatprep.subr.bf16.mxu0 0
        %434 = vmatpush1.bf16.msra.mxu0 0
        %435 = vmatprep.subr.bf16.mxu0 0
        %436 = vmatpush1.bf16.msra.mxu0 0
        %437 = vmatprep.mubr.bf16.mxu0 0
        %438 = vmatmul.mubr.bf16.gmra.mrb[0].mxu0 %v311
        %v439 = vpop.f32.mrb[0].mxu0
        %v440 = vadd.f32 0.0, %v439
        %v441 = vpop.f32.mrb[0].mxu0
        %v442 = vpop.f32.mrb[0].mxu0
        %v443 = vpop.f32.mrb[0].mxu0
        %444 = vdwg.mxu0
        %v445 = vadd.f32 %v305, %v440
        %v447 = vsel %vm217, %v398, 0
        %449 = vmatprep.subr.bf16.mxu0 0
        %450 = vmatpush1.bf16.msra.mxu0 %v403
        %451 = vmatprep.subr.bf16.mxu0 0
        %452 = vmatpush1.bf16.msra.mxu0 0
        %453 = vmatprep.subr.bf16.mxu0 0
        %454 = vmatpush1.bf16.msra.mxu0 0
        %455 = vmatprep.subr.bf16.mxu0 0
        %456 = vmatpush1.bf16.msra.mxu0 0
        %457 = vmatprep.subr.bf16.mxu0 0
        %458 = vmatpush1.bf16.msra.mxu0 0
        %459 = vmatprep.subr.bf16.mxu0 0
        %460 = vmatpush1.bf16.msra.mxu0 0
        %461 = vmatprep.subr.bf16.mxu0 0
        %462 = vmatpush1.bf16.msra.mxu0 0
        %463 = vmatprep.subr.bf16.mxu0 0
        %464 = vmatpush1.bf16.msra.mxu0 0
        %465 = vmatprep.subr.bf16.mxu0 0
        %466 = vmatpush1.bf16.msra.mxu0 0
        %467 = vmatprep.subr.bf16.mxu0 0
        %468 = vmatpush1.bf16.msra.mxu0 0
        %469 = vmatprep.subr.bf16.mxu0 0
        %470 = vmatpush1.bf16.msra.mxu0 0
        %471 = vmatprep.subr.bf16.mxu0 0
        %472 = vmatpush1.bf16.msra.mxu0 0
        %473 = vmatprep.subr.bf16.mxu0 0
        %474 = vmatpush1.bf16.msra.mxu0 0
        %475 = vmatprep.subr.bf16.mxu0 0
        %476 = vmatpush1.bf16.msra.mxu0 0
        %477 = vmatprep.subr.bf16.mxu0 0
        %478 = vmatpush1.bf16.msra.mxu0 0
        %479 = vmatprep.subr.bf16.mxu0 0
        %480 = vmatpush1.bf16.msra.mxu0 0
        %481 = vmatprep.mubr.bf16.mxu0 0
        %482 = vmatmul.mubr.bf16.gmra.mrb[0].mxu0 %v447
        %v483 = vpop.f32.mrb[0].mxu0
        %v484 = vadd.f32 0.0, %v483
        %v485 = vpop.f32.mrb[0].mxu0
        %v486 = vpop.f32.mrb[0].mxu0
        %v487 = vpop.f32.mrb[0].mxu0
        %488 = vdwg.mxu0
        %v489 = vadd.f32 %v388, %v484
        %s490 = scalar_lea.vmem [#allocation2], 24
        %v491 = vld [vmem:[%s490] sm:$0xf]
        %v492 = vld [vmem:[%s490 + $0x4] sm:$0xf]
        %s493 = scalar_lea.vmem %s192, 4
        %v494 = vld [vmem:[%s493] ss:$2 sm:$0xff]
        %v495 = vpack.c.bf16 %v494, %v494
        %v498 = vunpack.c.l.b16 %v491
        %v499 = vunpack.c.l.b16 %v492
        %v500 = vpack.c.b16 %v499, %v498
        %502 = vmatprep.subr.bf16.mxu0 0
        %503 = vmatpush1.bf16.msra.mxu0 %v500
        %504 = vmatprep.subr.bf16.mxu0 0
        %505 = vmatpush1.bf16.msra.mxu0 0
        %506 = vmatprep.subr.bf16.mxu0 0
        %507 = vmatpush1.bf16.msra.mxu0 0
        %508 = vmatprep.subr.bf16.mxu0 0
        %509 = vmatpush1.bf16.msra.mxu0 0
        %510 = vmatprep.subr.bf16.mxu0 0
        %511 = vmatpush1.bf16.msra.mxu0 0
        %512 = vmatprep.subr.bf16.mxu0 0
        %513 = vmatpush1.bf16.msra.mxu0 0
        %514 = vmatprep.subr.bf16.mxu0 0
        %515 = vmatpush1.bf16.msra.mxu0 0
        %516 = vmatprep.subr.bf16.mxu0 0
        %517 = vmatpush1.bf16.msra.mxu0 0
        %518 = vmatprep.subr.bf16.mxu0 0
        %519 = vmatpush1.bf16.msra.mxu0 0
        %520 = vmatprep.subr.bf16.mxu0 0
        %521 = vmatpush1.bf16.msra.mxu0 0
        %522 = vmatprep.subr.bf16.mxu0 0
        %523 = vmatpush1.bf16.msra.mxu0 0
        %524 = vmatprep.subr.bf16.mxu0 0
        %525 = vmatpush1.bf16.msra.mxu0 0
        %526 = vmatprep.subr.bf16.mxu0 0
        %527 = vmatpush1.bf16.msra.mxu0 0
        %528 = vmatprep.subr.bf16.mxu0 0
        %529 = vmatpush1.bf16.msra.mxu0 0
        %530 = vmatprep.subr.bf16.mxu0 0
        %531 = vmatpush1.bf16.msra.mxu0 0
        %532 = vmatprep.subr.bf16.mxu0 0
        %533 = vmatpush1.bf16.msra.mxu0 0
        %534 = vmatprep.mubr.bf16.mxu0 0
        %535 = vmatmul.mubr.bf16.gmra.mrb[0].mxu0 %v447
        %v536 = vpop.f32.mrb[0].mxu0
        %v537 = vadd.f32 0.0, %v536
        %v538 = vpop.f32.mrb[0].mxu0
        %v539 = vpop.f32.mrb[0].mxu0
        %v540 = vpop.f32.mrb[0].mxu0
        %541 = vdwg.mxu0
        %v542 = vadd.f32 %v445, %v537
        %v544 = vsel %vm217, %v495, 0
        %546 = vmatprep.subr.bf16.mxu0 0
        %547 = vmatpush1.bf16.msra.mxu0 %v500
        %548 = vmatprep.subr.bf16.mxu0 0
        %549 = vmatpush1.bf16.msra.mxu0 0
        %550 = vmatprep.subr.bf16.mxu0 0
        %551 = vmatpush1.bf16.msra.mxu0 0
        %552 = vmatprep.subr.bf16.mxu0 0
        %553 = vmatpush1.bf16.msra.mxu0 0
        %554 = vmatprep.subr.bf16.mxu0 0
        %555 = vmatpush1.bf16.msra.mxu0 0
        %556 = vmatprep.subr.bf16.mxu0 0
        %557 = vmatpush1.bf16.msra.mxu0 0
        %558 = vmatprep.subr.bf16.mxu0 0
        %559 = vmatpush1.bf16.msra.mxu0 0
        %560 = vmatprep.subr.bf16.mxu0 0
        %561 = vmatpush1.bf16.msra.mxu0 0
        %562 = vmatprep.subr.bf16.mxu0 0
        %563 = vmatpush1.bf16.msra.mxu0 0
        %564 = vmatprep.subr.bf16.mxu0 0
        %565 = vmatpush1.bf16.msra.mxu0 0
        %566 = vmatprep.subr.bf16.mxu0 0
        %567 = vmatpush1.bf16.msra.mxu0 0
        %568 = vmatprep.subr.bf16.mxu0 0
        %569 = vmatpush1.bf16.msra.mxu0 0
        %570 = vmatprep.subr.bf16.mxu0 0
        %571 = vmatpush1.bf16.msra.mxu0 0
        %572 = vmatprep.subr.bf16.mxu0 0
        %573 = vmatpush1.bf16.msra.mxu0 0
        %574 = vmatprep.subr.bf16.mxu0 0
        %575 = vmatpush1.bf16.msra.mxu0 0
        %576 = vmatprep.subr.bf16.mxu0 0
        %577 = vmatpush1.bf16.msra.mxu0 0
        %578 = vmatprep.mubr.bf16.mxu0 0
        %579 = vmatmul.mubr.bf16.gmra.mrb[0].mxu0 %v544
        %v580 = vpop.f32.mrb[0].mxu0
        %v581 = vadd.f32 0.0, %v580
        %v582 = vpop.f32.mrb[0].mxu0
        %v583 = vpop.f32.mrb[0].mxu0
        %v584 = vpop.f32.mrb[0].mxu0
        %585 = vdwg.mxu0
        %v586 = vadd.f32 %v489, %v581
        %s587 = scalar_lea.vmem [#allocation2], 32
        %v588 = vld [vmem:[%s587] sm:$0xf]
        %v589 = vld [vmem:[%s587 + $0x4] sm:$0xf]
        %s590 = scalar_lea.vmem %s192, 5
        %v591 = vld [vmem:[%s590] ss:$2 sm:$0xff]
        %v592 = vpack.c.bf16 %v591, %v591
        %v595 = vunpack.c.l.b16 %v588
        %v596 = vunpack.c.l.b16 %v589
        %v597 = vpack.c.b16 %v596, %v595
        %599 = vmatprep.subr.bf16.mxu0 0
        %600 = vmatpush1.bf16.msra.mxu0 %v597
        %601 = vmatprep.subr.bf16.mxu0 0
        %602 = vmatpush1.bf16.msra.mxu0 0
        %603 = vmatprep.subr.bf16.mxu0 0
        %604 = vmatpush1.bf16.msra.mxu0 0
        %605 = vmatprep.subr.bf16.mxu0 0
        %606 = vmatpush1.bf16.msra.mxu0 0
        %607 = vmatprep.subr.bf16.mxu0 0
        %608 = vmatpush1.bf16.msra.mxu0 0
        %609 = vmatprep.subr.bf16.mxu0 0
        %610 = vmatpush1.bf16.msra.mxu0 0
        %611 = vmatprep.subr.bf16.mxu0 0
        %612 = vmatpush1.bf16.msra.mxu0 0
        %613 = vmatprep.subr.bf16.mxu0 0
        %614 = vmatpush1.bf16.msra.mxu0 0
        %615 = vmatprep.subr.bf16.mxu0 0
        %616 = vmatpush1.bf16.msra.mxu0 0
        %617 = vmatprep.subr.bf16.mxu0 0
        %618 = vmatpush1.bf16.msra.mxu0 0
        %619 = vmatprep.subr.bf16.mxu0 0
        %620 = vmatpush1.bf16.msra.mxu0 0
        %621 = vmatprep.subr.bf16.mxu0 0
        %622 = vmatpush1.bf16.msra.mxu0 0
        %623 = vmatprep.subr.bf16.mxu0 0
        %624 = vmatpush1.bf16.msra.mxu0 0
        %625 = vmatprep.subr.bf16.mxu0 0
        %626 = vmatpush1.bf16.msra.mxu0 0
        %627 = vmatprep.subr.bf16.mxu0 0
        %628 = vmatpush1.bf16.msra.mxu0 0
        %629 = vmatprep.subr.bf16.mxu0 0
        %630 = vmatpush1.bf16.msra.mxu0 0
        %631 = vmatprep.mubr.bf16.mxu0 0
        %632 = vmatmul.mubr.bf16.gmra.mrb[0].mxu0 %v544
        %v633 = vpop.f32.mrb[0].mxu0
        %v634 = vadd.f32 0.0, %v633
        %v635 = vpop.f32.mrb[0].mxu0
        %v636 = vpop.f32.mrb[0].mxu0
        %v637 = vpop.f32.mrb[0].mxu0
        %638 = vdwg.mxu0
        %v639 = vadd.f32 %v542, %v634
        %v641 = vsel %vm217, %v592, 0
        %643 = vmatprep.subr.bf16.mxu0 0
        %644 = vmatpush1.bf16.msra.mxu0 %v597
        %645 = vmatprep.subr.bf16.mxu0 0
        %646 = vmatpush1.bf16.msra.mxu0 0
        %647 = vmatprep.subr.bf16.mxu0 0
        %648 = vmatpush1.bf16.msra.mxu0 0
        %649 = vmatprep.subr.bf16.mxu0 0
        %650 = vmatpush1.bf16.msra.mxu0 0
        %651 = vmatprep.subr.bf16.mxu0 0
        %652 = vmatpush1.bf16.msra.mxu0 0
        %653 = vmatprep.subr.bf16.mxu0 0
        %654 = vmatpush1.bf16.msra.mxu0 0
        %655 = vmatprep.subr.bf16.mxu0 0
        %656 = vmatpush1.bf16.msra.mxu0 0
        %657 = vmatprep.subr.bf16.mxu0 0
        %658 = vmatpush1.bf16.msra.mxu0 0
        %659 = vmatprep.subr.bf16.mxu0 0
        %660 = vmatpush1.bf16.msra.mxu0 0
        %661 = vmatprep.subr.bf16.mxu0 0
        %662 = vmatpush1.bf16.msra.mxu0 0
        %663 = vmatprep.subr.bf16.mxu0 0
        %664 = vmatpush1.bf16.msra.mxu0 0
        %665 = vmatprep.subr.bf16.mxu0 0
        %666 = vmatpush1.bf16.msra.mxu0 0
        %667 = vmatprep.subr.bf16.mxu0 0
        %668 = vmatpush1.bf16.msra.mxu0 0
        %669 = vmatprep.subr.bf16.mxu0 0
        %670 = vmatpush1.bf16.msra.mxu0 0
        %671 = vmatprep.subr.bf16.mxu0 0
        %672 = vmatpush1.bf16.msra.mxu0 0
        %673 = vmatprep.subr.bf16.mxu0 0
        %674 = vmatpush1.bf16.msra.mxu0 0
        %675 = vmatprep.mubr.bf16.mxu0 0
        %676 = vmatmul.mubr.bf16.gmra.mrb[0].mxu0 %v641
        %v677 = vpop.f32.mrb[0].mxu0
        %v678 = vadd.f32 0.0, %v677
        %v679 = vpop.f32.mrb[0].mxu0
        %v680 = vpop.f32.mrb[0].mxu0
        %v681 = vpop.f32.mrb[0].mxu0
        %682 = vdwg.mxu0
        %v683 = vadd.f32 %v586, %v678
        %v684 = vmax.f32 %v639, %v683
        %686 = vrot.lane.b32.xlu0 %v684, 96
        %v687 = vpop.permute.xlu0 %686
        %v689 = vmax.f32 %v684, %v687
        %v690 = vld [vmem:[#allocation4] sm:$0x1]
        %v692 = vlaneseq
        %v693 = vshrl.u32 %v692, 7
        %v694 = vsub.s32 0, %v693
        %v695 = vrot.slane %v690, %v694
        %v697 = vadd.f32 %v689, %v695
        %v698 = vmax.f32 %v697, 0.0
        %vm699 = vcmask 261120
        %700 = vst.msk [vmem:[%s196] sm:$0xff] %vm699, %v698
        %p701 = scmp.lt.s32.totalorder %s16, 1
        %s702 = scalar_select %p701, %s16, 1
        %s703 = smul.addr %s702, 8
        %s704 = scalar_lea.vmem %s3, %s703
        // Predicated region
        $region41: #{_lambda_.2} parent=31 // pred_check
          %p705 = pneg %p102
        $region42: #{_lambda_.2} parent=31 // pred_check_branch
          %707 = sbr.rel (%p705) target = $region44
        $region43: #{_lambda_.2} parent=31 // pred_region
          _
        $region44: #{_lambda_.2} parent=31 // pred_fallthru
          _
      $region32: #{_lambda_.2} parent=5 // pred_fallthru
        _
      %p708 = scmp.le.s32.totalorder 2, %s11
      // Predicated region
      $region45: #{_lambda_.2} parent=5 // pred_check
        %p709 = pneg %p708
      $region46: #{_lambda_.2} parent=5 // pred_check_branch
        %711 = sbr.rel (%p709) target = $region48
      $region47: #{_lambda_.2} parent=5 // pred_region
        %s712 = ssub.s32 %s11, 2
        // Predicated region
        $region49: #{_lambda_.2} parent=47 // pred_check
          %p713 = pneg %p108
        $region50: #{_lambda_.2} parent=47 // pred_check_branch
          %715 = sbr.rel (%p713) target = $region52
        $region51: #{_lambda_.2} parent=47 // pred_region
          %p716 = scmp.lt.s32.totalorder %s17, 1
          %s717 = scalar_select %p716, %s17, 1
          %s718 = smul.addr %s717, 8
          %s719 = scalar_lea.vmem %s3, %s718
        $region52: #{_lambda_.2} parent=47 // pred_fallthru
          _
      $region48: #{_lambda_.2} parent=5 // pred_fallthru
        _
    $region6: #{_lambda_.2} parent=1 // loop_footer
      %s15 = sadd.s32 1, %s11
    $region7: #{_lambda_.2} parent=1 // loop_footer_branch
      %10 = sbr.rel target = $region3
    $region8: #{_lambda_.2} parent=1 // loop_exit
      _
    %720 = vsyncpa [#allocation3], 1
    %s721 = scalar_lea.sflag [#allocation3], 1
    %722 = vsyncpa %s721, 1
    %723 = vsyncpa [#allocation5], 1

</llo_original>
